<compile_context>
chip_gen: v7x
topology: tpu7x:2x2x1
jax: 0.10.0
libtpu: 0.0.40
codegen_flags: <defaults>
</compile_context>

<pallas_src>
import functools

import jax
import jax.numpy as jnp
from jax.experimental import pallas as pl
from jax.experimental.pallas import tpu as pltpu

_SUBLANE = 16   # row-tile granularity (safe for bf16 sublane packing)
_LANE = 128     # lane width / output-feature padding granularity


def _round_up(x: int, m: int) -> int:
    return (x + m - 1) // m * m


def _cdiv(a: int, b: int) -> int:
    return (a + b - 1) // b


def encoder_mlp_kernel(x_ref, t_ref, w1x_ref, w1t_ref, b1_ref, w2_ref, b2_ref,
                       o_ref):
    # Layer 1: h = x @ W1_x + T @ W1_T + b1
    # (concat never materialized; bf16 operands, f32 MXU accumulation).
    h = jnp.dot(x_ref[...], w1x_ref[...], preferred_element_type=jnp.float32)
    h = h + jnp.dot(t_ref[...], w1t_ref[...],
                    preferred_element_type=jnp.float32)
    h = h + b1_ref[...]
    # Layer 2: o = h @ W2 + b2 (feed the MXU bf16 again, accumulate f32).
    o = jnp.dot(h.astype(w2_ref.dtype), w2_ref[...],
                preferred_element_type=jnp.float32)
    o = o + b2_ref[...]
    o_ref[...] = o.astype(o_ref.dtype)


def prepare_params(w1, b1, w2, b2, in_dim, *, compute_dtype=jnp.bfloat16):
    """One-time parameter prep (call once, outside the per-step path).

    Splits W1 into its x-rows and T-rows, zero-pads the output-feature dim to a
    multiple of 128 (lane-dense stores), and casts matmul operands to bf16.
    Weights stored as (in_features, out_features): z @ W + b == PyTorch Linear.
    """
    d_model = w2.shape[1]
    n_pad = _round_up(d_model, _LANE)
    pad = n_pad - d_model
    w1_x, w1_t = w1[:in_dim], w1[in_dim:]
    if pad:
        w1_x = jnp.pad(w1_x, ((0, 0), (0, pad)))
        w1_t = jnp.pad(w1_t, ((0, 0), (0, pad)))
        b1 = jnp.pad(b1, (0, pad))
        # Padded h columns are exactly 0, so zero rows of W2 change nothing.
        w2 = jnp.pad(w2, ((0, pad), (0, pad)))
        b2 = jnp.pad(b2, (0, pad))
    return (w1_x.astype(compute_dtype),
            w1_t.astype(compute_dtype),
            b1.reshape(1, n_pad).astype(jnp.float32),
            w2.astype(compute_dtype),
            b2.reshape(1, n_pad).astype(jnp.float32))


@functools.partial(jax.jit, static_argnames=("tile_m",))
def encoder_mlp(x, T, w1_x, w1_t, b1p, w2p, b2p, *, tile_m: int = 512):
    """x: (B, S, in_dim), T: (B, S, d_model) -> (B, S, d_model) float32."""
    B, S, in_dim = x.shape
    d_model = T.shape[-1]
    n_pad = w2p.shape[-1]
    M = B * S
    cdtype = w1_x.dtype
    in_bytes = jnp.dtype(cdtype).itemsize

    # ---- row tiling: multiple of 16, minimal padding (<=15 wasted rows), and
    #      >=2 grid steps when possible so v7x can split rows across its 2 TCs.
    min_steps = 2 if M >= 2 * _SUBLANE else 1
    steps = max(min_steps, _cdiv(M, tile_m))
    tile = _round_up(_cdiv(M, steps), _SUBLANE)
    steps = _cdiv(M, tile)
    m_pad = steps * tile

    x2 = x.reshape(M, in_dim).astype(cdtype)
    t2 = T.reshape(M, d_model).astype(cdtype)
    if m_pad != M:
        x2 = jnp.pad(x2, ((0, m_pad - M), (0, 0)))
        t2 = jnp.pad(t2, ((0, m_pad - M), (0, 0)))

    # ---- VMEM budget: streamed tiles double-buffered, weights single-buffered,
    #      plus the f32 h/o intermediates; 25% headroom, capped near 48 MiB.
    need = (2 * tile * (in_dim + d_model) * in_bytes        # x, T (double buf)
            + 2 * tile * n_pad * 4                          # out tile (double buf)
            + (in_dim + d_model + n_pad) * n_pad * in_bytes  # weights (Buffered(1))
            + 2 * 8 * n_pad * 4                             # biases (sublane-padded)
            + 2 * tile * n_pad * 4)                         # h / o f32 intermediates
    vmem_limit = int(max(32 << 20, min(48 << 20, int(1.25 * need))))
    if int(1.25 * need) > (48 << 20):
        # TODO(synk): add an N (output-feature) grid axis so very large d_model
        # tiles into v7x's 64 MiB/TC instead of relying on a bigger scoped limit.
        vmem_limit = int(min(100 << 20, int(1.25 * need)))

    cost = pl.CostEstimate(
        flops=2 * m_pad * ((in_dim + d_model) * n_pad + n_pad * n_pad),
        transcendentals=0,
        bytes_accessed=(m_pad * (in_dim + d_model) * in_bytes
                        + m_pad * n_pad * 4
                        + (in_dim + d_model + n_pad + 2) * n_pad * in_bytes),
    )

    def weight_spec(shape):
        # Constant index_map -> fetched once, single-buffered (halves weight VMEM).
        return pl.BlockSpec(shape, lambda i: (0, 0),
                            pipeline_mode=pl.Buffered(1))

    out = pl.pallas_call(
        encoder_mlp_kernel,
        out_shape=jax.ShapeDtypeStruct((m_pad, n_pad), jnp.float32),
        grid=(steps,),
        in_specs=[
            pl.BlockSpec((tile, in_dim), lambda i: (i, 0)),    # x rows (streamed)
            pl.BlockSpec((tile, d_model), lambda i: (i, 0)),   # T rows (streamed)
            weight_spec((in_dim, n_pad)),                      # W1_x (resident)
            weight_spec((d_model, n_pad)),                     # W1_T (resident)
            weight_spec((1, n_pad)),                           # b1
            weight_spec((n_pad, n_pad)),                       # W2 (resident)
            weight_spec((1, n_pad)),                           # b2
        ],
        out_specs=pl.BlockSpec((tile, n_pad), lambda i: (i, 0)),
        compiler_params=pltpu.CompilerParams(
            dimension_semantics=("parallel",),   # rows independent -> megacore
            vmem_limit_bytes=vmem_limit,
        ),
        cost_estimate=cost,
    )(x2, t2, w1_x, w1_t, b1p, w2p, b2p)

    if m_pad != M or n_pad != d_model:
        out = out[:M, :d_model]          # only pay the slice when padding happened
    return out.reshape(B, S, d_model)


def init_params(key, in_dim, d_model):
    """Deterministic PyTorch-Linear-style init (uniform +/- 1/sqrt(fan_in))."""
    k1, k2, k3, k4 = jax.random.split(key, 4)
    fan1 = in_dim + d_model
    bound1 = 1.0 / jnp.sqrt(fan1)
    w1 = jax.random.uniform(k1, (fan1, d_model), jnp.float32, -bound1, bound1)
    b1 = jax.random.uniform(k2, (d_model,), jnp.float32, -bound1, bound1)
    bound2 = 1.0 / jnp.sqrt(d_model)
    w2 = jax.random.uniform(k3, (d_model, d_model), jnp.float32, -bound2, bound2)
    b2 = jax.random.uniform(k4, (d_model,), jnp.float32, -bound2, bound2)
    return w1, b1, w2, b2


if __name__ == "__main__":
    def run_case(B, S, in_dim, d_model):
        key = jax.random.PRNGKey(0)
        kx, kt, kp = jax.random.split(key, 3)
        x = jax.random.normal(kx, (B, S, in_dim), jnp.float32)
        T = jax.random.normal(kt, (B, S, d_model), jnp.float32)
        w1, b1, w2, b2 = init_params(kp, in_dim, d_model)

        params = prepare_params(w1, b1, w2, b2, in_dim)   # one-time prep
        out = jax.block_until_ready(encoder_mlp(x, T, *params))

        # Exact-f32 reference with PyTorch semantics (concat -> two Linears).
        z = jnp.concatenate([x, T], axis=-1).reshape(B * S, in_dim + d_model)
        ref = jnp.einsum("mk,kn->mn", z, w1,
                         precision=jax.lax.Precision.HIGHEST) + b1
        ref = jnp.einsum("mk,kn->mn", ref, w2,
                         precision=jax.lax.Precision.HIGHEST) + b2
        ref = ref.reshape(B, S, d_model)

        assert out.shape == (B, S, d_model)
        err = float(jnp.max(jnp.abs(out - ref)))
        # bf16-fed MXU: expect ~1e-2 absolute drift vs the exact-f32 reference.
        assert jnp.allclose(out, ref, atol=5e-2, rtol=5e-2), err

    # Tiny shape from the original module test (exercises the N->128 pad path).
    run_case(B=2, S=8, in_dim=16, d_model=32)
    # Lane-dense d_model and a multi-step row grid (exercises the pipeline).
    run_case(B=4, S=256, in_dim=16, d_model=128)

    print("KERNEL_OK")
</pallas_src>

<mosaic_0001>
module attributes {stable_mosaic.version = 11 : i64} {
  func.func @encoder_mlp_kernel(%arg0: i32, %arg1: memref<16x16xbf16, #tpu.memory_space<vmem>>, %arg2: memref<16x32xbf16, #tpu.memory_space<vmem>>, %arg3: memref<16x128xbf16, #tpu.memory_space<vmem>>, %arg4: memref<32x128xbf16, #tpu.memory_space<vmem>>, %arg5: memref<1x128xf32, #tpu.memory_space<vmem>>, %arg6: memref<128x128xbf16, #tpu.memory_space<vmem>>, %arg7: memref<1x128xf32, #tpu.memory_space<vmem>>, %arg8: memref<16x128xf32, #tpu.memory_space<vmem>>) attributes {dimension_semantics = [#tpu.dimension_semantics<parallel>], iteration_bounds = array<i64: 1>, scalar_prefetch = 0 : i64, scratch_operands = 0 : i64, tpu.core_type = #tpu.core_type<tc>, window_params = [{transform_indices = @transform_0, window_bounds = array<i64: 16, 16>}, {transform_indices = @transform_1, window_bounds = array<i64: 16, 32>}, {pipeline_mode = #tpu.pipeline_mode<synchronous>, transform_indices = @transform_2, window_bounds = array<i64: 16, 128>}, {pipeline_mode = #tpu.pipeline_mode<synchronous>, transform_indices = @transform_3, window_bounds = array<i64: 32, 128>}, {pipeline_mode = #tpu.pipeline_mode<synchronous>, transform_indices = @transform_4, window_bounds = array<i64: 1, 128>}, {pipeline_mode = #tpu.pipeline_mode<synchronous>, transform_indices = @transform_5, window_bounds = array<i64: 128, 128>}, {pipeline_mode = #tpu.pipeline_mode<synchronous>, transform_indices = @transform_6, window_bounds = array<i64: 1, 128>}, {transform_indices = @transform_7, window_bounds = array<i64: 16, 128>}]} {
    %c0 = arith.constant 0 : index
    %c0_0 = arith.constant 0 : index
    %0 = vector.load %arg1[%c0, %c0_0] : memref<16x16xbf16, #tpu.memory_space<vmem>>, vector<16x16xbf16>
    %c0_1 = arith.constant 0 : index
    %c0_2 = arith.constant 0 : index
    %1 = vector.load %arg3[%c0_1, %c0_2] : memref<16x128xbf16, #tpu.memory_space<vmem>>, vector<16x128xbf16>
    %cst = arith.constant dense<0.000000e+00> : vector<16x128xf32>
    %2 = tpu.matmul %0, %1, %cst {dimension_numbers = #tpu.dot_dimension_numbers<[1], [0], [0], [1], [0, 0, 1, 1], [], []>} : vector<16x16xbf16>, vector<16x128xbf16>, vector<16x128xf32> -> vector<16x128xf32>
    %c0_3 = arith.constant 0 : index
    %c0_4 = arith.constant 0 : index
    %3 = vector.load %arg2[%c0_3, %c0_4] : memref<16x32xbf16, #tpu.memory_space<vmem>>, vector<16x32xbf16>
    %c0_5 = arith.constant 0 : index
    %c0_6 = arith.constant 0 : index
    %4 = vector.load %arg4[%c0_5, %c0_6] : memref<32x128xbf16, #tpu.memory_space<vmem>>, vector<32x128xbf16>
    %cst_7 = arith.constant dense<0.000000e+00> : vector<16x128xf32>
    %5 = tpu.matmul %3, %4, %cst_7 {dimension_numbers = #tpu.dot_dimension_numbers<[1], [0], [0], [1], [0, 0, 1, 1], [], []>} : vector<16x32xbf16>, vector<32x128xbf16>, vector<16x128xf32> -> vector<16x128xf32>
    %6 = arith.addf %2, %5 : vector<16x128xf32>
    %c0_8 = arith.constant 0 : index
    %c0_9 = arith.constant 0 : index
    %7 = vector.load %arg5[%c0_8, %c0_9] : memref<1x128xf32, #tpu.memory_space<vmem>>, vector<1x128xf32>
    %8 = vector.broadcast %7 : vector<1x128xf32> to vector<16x128xf32>
    %9 = arith.addf %6, %8 : vector<16x128xf32>
    %10 = arith.truncf %9 : vector<16x128xf32> to vector<16x128xbf16>
    %c0_10 = arith.constant 0 : index
    %c0_11 = arith.constant 0 : index
    %11 = vector.load %arg6[%c0_10, %c0_11] : memref<128x128xbf16, #tpu.memory_space<vmem>>, vector<128x128xbf16>
    %cst_12 = arith.constant dense<0.000000e+00> : vector<16x128xf32>
    %12 = tpu.matmul %10, %11, %cst_12 {dimension_numbers = #tpu.dot_dimension_numbers<[1], [0], [0], [1], [0, 0, 1, 1], [], []>} : vector<16x128xbf16>, vector<128x128xbf16>, vector<16x128xf32> -> vector<16x128xf32>
    %c0_13 = arith.constant 0 : index
    %c0_14 = arith.constant 0 : index
    %13 = vector.load %arg7[%c0_13, %c0_14] : memref<1x128xf32, #tpu.memory_space<vmem>>, vector<1x128xf32>
    %14 = vector.broadcast %13 : vector<1x128xf32> to vector<16x128xf32>
    %15 = arith.addf %12, %14 : vector<16x128xf32>
    %c0_15 = arith.constant 0 : index
    %c0_16 = arith.constant 0 : index
    %16 = vector.load %arg8[%c0_15, %c0_16] : memref<16x128xf32, #tpu.memory_space<vmem>>, vector<16x128xf32>
    tpu.vector_store %arg8[%c0_15, %c0_16], %15 {strides = array<i32>} : memref<16x128xf32, #tpu.memory_space<vmem>>, vector<16x128xf32>,
    return
  }
  func.func @transform_0(%arg0: i32) -> (i32, i32) {
    %c0_i32 = arith.constant 0 : i32
    %c0_i32_0 = arith.constant 0 : i32
    return %arg0, %c0_i32 : i32, i32
  }
  func.func @transform_1(%arg0: i32) -> (i32, i32) {
    %c0_i32 = arith.constant 0 : i32
    %c0_i32_0 = arith.constant 0 : i32
    return %arg0, %c0_i32 : i32, i32
  }
  func.func @transform_2(%arg0: i32) -> (i32, i32) {
    %c0_i32 = arith.constant 0 : i32
    %c0_i32_0 = arith.constant 0 : i32
    %c0_i32_1 = arith.constant 0 : i32
    return %c0_i32, %c0_i32_0 : i32, i32
  }
  func.func @transform_3(%arg0: i32) -> (i32, i32) {
    %c0_i32 = arith.constant 0 : i32
    %c0_i32_0 = arith.constant 0 : i32
    %c0_i32_1 = arith.constant 0 : i32
    return %c0_i32, %c0_i32_0 : i32, i32
  }
  func.func @transform_4(%arg0: i32) -> (i32, i32) {
    %c0_i32 = arith.constant 0 : i32
    %c0_i32_0 = arith.constant 0 : i32
    %c0_i32_1 = arith.constant 0 : i32
    return %c0_i32, %c0_i32_0 : i32, i32
  }
  func.func @transform_5(%arg0: i32) -> (i32, i32) {
    %c0_i32 = arith.constant 0 : i32
    %c0_i32_0 = arith.constant 0 : i32
    %c0_i32_1 = arith.constant 0 : i32
    return %c0_i32, %c0_i32_0 : i32, i32
  }
  func.func @transform_6(%arg0: i32) -> (i32, i32) {
    %c0_i32 = arith.constant 0 : i32
    %c0_i32_0 = arith.constant 0 : i32
    %c0_i32_1 = arith.constant 0 : i32
    return %c0_i32, %c0_i32_0 : i32, i32
  }
  func.func @transform_7(%arg0: i32) -> (i32, i32) {
    %c0_i32 = arith.constant 0 : i32
    %c0_i32_0 = arith.constant 0 : i32
    return %arg0, %c0_i32 : i32, i32
  }
}

</mosaic_0001>

<llo_original>
// kernel: encoder_mlp.1
$region0: #{encoder_mlp.1}
  #allocation0 [shape = 'u32[]', space=smem, size = 0x4, offset = 0x4, fixed_abs, tag = 'smem constant byte address 0x4 - core index']
  #allocation1 [shape = 'u32[144,128]{1,0:T(1,128)}', space=vmem, size = 0x12000, scoped, tag = 'internal scratch']
  %s0 = inlined_call_operand.vmem [shape: bf16[16,16], index: 0, kind: input, shape index: {}]
  %s1 = inlined_call_operand.vmem [shape: bf16[16,32], index: 1, kind: input, shape index: {}]
  %s2 = inlined_call_operand.hbm [shape: bf16[16,128], index: 2, kind: input, shape index: {}]
  %s3 = inlined_call_operand.hbm [shape: bf16[32,128], index: 3, kind: input, shape index: {}]
  %s4 = inlined_call_operand.vmem [shape: f32[1,128], index: 4, kind: input, shape index: {}]
  %s5 = inlined_call_operand.vmem [shape: bf16[128,128], index: 5, kind: input, shape index: {}]
  %s6 = inlined_call_operand.vmem [shape: f32[1,128], index: 6, kind: input, shape index: {}]
  %s7 = inlined_call_operand.vmem [shape: f32[16,128], index: 7, kind: output, shape index: {}]
  %s8 = sld [smem:[#allocation0]]
  $region46: #{encoder_mlp.1} parent=0
    _
  %s10 = ssub.s32 1, %s8
  %s11 = scalar_select 0, %s10, %s8
  $region1: #{encoder_mlp.1} parent=0
    #allocation2 [shape = 'u8[4096]{0}', space=vmem, size = 0x1000, scoped, tag = 'input window, operand 2, single buffered']
    #allocation3 [shape = 's32[1]{0}', space=sflag, size = 0x4, scoped, tag = 'scoped memory for encoder_mlp.1']
    #allocation4 [shape = 'u8[8192]{0}', space=vmem, size = 0x2000, scoped, tag = 'input window, operand 3, single buffered']
    #allocation5 [shape = 's32[1]{0}', space=sflag, size = 0x4, scoped, tag = 'scoped memory for encoder_mlp.1']
    %12 = vsyncpa [#allocation3], 0
    %13 = vsyncpa [#allocation5], 0
    // Predicated region
    $region2: #{encoder_mlp.1} parent=1 // pred_check
      _
    $region3: #{encoder_mlp.1} parent=1 // pred_check_branch
      %15 = sbr.rel (0) target = $region5
    $region4: #{encoder_mlp.1} parent=1 // pred_region
      _
    $region5: #{encoder_mlp.1} parent=1 // pred_fallthru
      _
    // Predicated region
    $region6: #{encoder_mlp.1} parent=1 // pred_check
      _
    $region7: #{encoder_mlp.1} parent=1 // pred_check_branch
      %17 = sbr.rel (0) target = $region9
    $region8: #{encoder_mlp.1} parent=1 // pred_region
      _
    $region9: #{encoder_mlp.1} parent=1 // pred_fallthru
      _
    // Predicated region
    $region10: #{encoder_mlp.1} parent=1 // pred_check
      _
    $region11: #{encoder_mlp.1} parent=1 // pred_check_branch
      %19 = sbr.rel (0) target = $region13
    $region12: #{encoder_mlp.1} parent=1 // pred_region
      %s21 = ssub.s32 128, 128
      %22 = vsyncadd [#allocation3], %s21
      %s23 = sshll.u32 [#allocation2], 4
      %s24 = int_to_ptr.vmem [resolvable:$true] %s23
      %29 = dma.hbm_to_vmem [thread:$0]  %s2, 128, %s24, [#allocation3], 64, 64, 4
    $region13: #{encoder_mlp.1} parent=1 // pred_fallthru
      _
    // Predicated region
    $region14: #{encoder_mlp.1} parent=1 // pred_check
      _
    $region15: #{encoder_mlp.1} parent=1 // pred_check_branch
      %31 = sbr.rel (0) target = $region17
    $region16: #{encoder_mlp.1} parent=1 // pred_region
      %s33 = ssub.s32 256, 256
      %34 = vsyncadd [#allocation5], %s33
      %s35 = sshll.u32 [#allocation4], 4
      %s36 = int_to_ptr.vmem [resolvable:$true] %s35
      %41 = dma.hbm_to_vmem [thread:$0]  %s3, 256, %s36, [#allocation5], 64, 64, 4
    $region17: #{encoder_mlp.1} parent=1 // pred_fallthru
      _
    // Predicated region
    $region18: #{encoder_mlp.1} parent=1 // pred_check
      _
    $region19: #{encoder_mlp.1} parent=1 // pred_check_branch
      %43 = sbr.rel (0) target = $region21
    $region20: #{encoder_mlp.1} parent=1 // pred_region
      _
    $region21: #{encoder_mlp.1} parent=1 // pred_fallthru
      _
    // Predicated region
    $region22: #{encoder_mlp.1} parent=1 // pred_check
      _
    $region23: #{encoder_mlp.1} parent=1 // pred_check_branch
      %45 = sbr.rel (0) target = $region25
    $region24: #{encoder_mlp.1} parent=1 // pred_region
      _
    $region25: #{encoder_mlp.1} parent=1 // pred_fallthru
      _
    // Predicated region
    $region26: #{encoder_mlp.1} parent=1 // pred_check
      _
    $region27: #{encoder_mlp.1} parent=1 // pred_check_branch
      %47 = sbr.rel (0) target = $region29
    $region28: #{encoder_mlp.1} parent=1 // pred_region
      _
    $region29: #{encoder_mlp.1} parent=1 // pred_fallthru
      _
    // Predicated region
    $region30: #{encoder_mlp.1} parent=1 // pred_check
      _
    $region31: #{encoder_mlp.1} parent=1 // pred_check_branch
      %49 = sbr.rel (0) target = $region33
    $region32: #{encoder_mlp.1} parent=1 // pred_region
      %50 = dma.done [#allocation3], 128
    $region33: #{encoder_mlp.1} parent=1 // pred_fallthru
      _
    // Predicated region
    $region34: #{encoder_mlp.1} parent=1 // pred_check
      _
    $region35: #{encoder_mlp.1} parent=1 // pred_check_branch
      %52 = sbr.rel (0) target = $region37
    $region36: #{encoder_mlp.1} parent=1 // pred_region
      %53 = dma.done [#allocation5], 256
    $region37: #{encoder_mlp.1} parent=1 // pred_fallthru
      _
    %v55 = vld [vmem:[%s0] sm:$0xf]
    %v56 = vld [vmem:[%s0 + $0x4] sm:$0xf]
    %v57 = vld [vmem:[#allocation2] sm:$0xf]
    %v58 = vld [vmem:[#allocation2 + $0x4] sm:$0xf]
    %v59 = vld [vmem:[%s1] sm:$0xf]
    %v60 = vld [vmem:[%s1 + $0x4] sm:$0xf]
    %v61 = vld [vmem:[#allocation4] sm:$0xf]
    %v62 = vld [vmem:[#allocation4 + $0x4] sm:$0xf]
    %v63 = vld [vmem:[#allocation4 + $0x8] sm:$0xf]
    %v64 = vld [vmem:[#allocation4 + $0xc] sm:$0xf]
    %v67 = vunpack.c.l.b16 %v59
    %v68 = vunpack.c.l.b16 %v60
    %v69 = vpack.c.b16 %v68, %v67
    %v74 = vunpack.c.l.b16 %v61
    %v75 = vunpack.c.l.b16 %v62
    %v76 = vunpack.c.l.b16 %v63
    %v77 = vunpack.c.l.b16 %v64
    %v78 = vpack.c.b16 %v75, %v74
    %v79 = vpack.c.b16 %v77, %v76
    %vm82 = vcmask 261120
    %v84 = vsel %vm82, %v69, 0
    %86 = vmatprep.subr.bf16.mxu0 0
    %87 = vmatpush1.bf16.msra.mxu0 %v78
    %88 = vmatprep.subr.bf16.mxu0 0
    %89 = vmatpush1.bf16.msra.mxu0 %v79
    %90 = vmatprep.subr.bf16.mxu0 0
    %91 = vmatpush1.bf16.msra.mxu0 0
    %92 = vmatprep.subr.bf16.mxu0 0
    %93 = vmatpush1.bf16.msra.mxu0 0
    %94 = vmatprep.subr.bf16.mxu0 0
    %95 = vmatpush1.bf16.msra.mxu0 0
    %96 = vmatprep.subr.bf16.mxu0 0
    %97 = vmatpush1.bf16.msra.mxu0 0
    %98 = vmatprep.subr.bf16.mxu0 0
    %99 = vmatpush1.bf16.msra.mxu0 0
    %100 = vmatprep.subr.bf16.mxu0 0
    %101 = vmatpush1.bf16.msra.mxu0 0
    %102 = vmatprep.subr.bf16.mxu0 0
    %103 = vmatpush1.bf16.msra.mxu0 0
    %104 = vmatprep.subr.bf16.mxu0 0
    %105 = vmatpush1.bf16.msra.mxu0 0
    %106 = vmatprep.subr.bf16.mxu0 0
    %107 = vmatpush1.bf16.msra.mxu0 0
    %108 = vmatprep.subr.bf16.mxu0 0
    %109 = vmatpush1.bf16.msra.mxu0 0
    %110 = vmatprep.subr.bf16.mxu0 0
    %111 = vmatpush1.bf16.msra.mxu0 0
    %112 = vmatprep.subr.bf16.mxu0 0
    %113 = vmatpush1.bf16.msra.mxu0 0
    %114 = vmatprep.subr.bf16.mxu0 0
    %115 = vmatpush1.bf16.msra.mxu0 0
    %116 = vmatprep.subr.bf16.mxu0 0
    %117 = vmatpush1.bf16.msra.mxu0 0
    %118 = vmatprep.mubr.bf16.mxu0 0
    %119 = vmatmul.mubr.bf16.gmra.mrb[0].mxu0 %v84
    %v120 = vpop.f32.mrb[0].mxu0
    %v121 = vadd.f32 0.0, %v120
    %v122 = vpop.f32.mrb[0].mxu0
    %v123 = vpop.f32.mrb[0].mxu0
    %v124 = vadd.f32 0.0, %v123
    %v125 = vpop.f32.mrb[0].mxu0
    %126 = vdwg.mxu0
    %v129 = vunpack.c.l.b16 %v55
    %v130 = vunpack.c.l.b16 %v56
    %v131 = vpack.c.b16 %v130, %v129
    %v134 = vunpack.c.l.b16 %v57
    %v135 = vunpack.c.l.b16 %v58
    %v136 = vpack.c.b16 %v135, %v134
    %vm138 = vcmask 130048
    %v140 = vsel %vm138, %v131, 0
    %142 = vmatprep.subr.bf16.mxu0 0
    %143 = vmatpush1.bf16.msra.mxu0 %v136
    %144 = vmatprep.subr.bf16.mxu0 0
    %145 = vmatpush1.bf16.msra.mxu0 0
    %146 = vmatprep.subr.bf16.mxu0 0
    %147 = vmatpush1.bf16.msra.mxu0 0
    %148 = vmatprep.subr.bf16.mxu0 0
    %149 = vmatpush1.bf16.msra.mxu0 0
    %150 = vmatprep.subr.bf16.mxu0 0
    %151 = vmatpush1.bf16.msra.mxu0 0
    %152 = vmatprep.subr.bf16.mxu0 0
    %153 = vmatpush1.bf16.msra.mxu0 0
    %154 = vmatprep.subr.bf16.mxu0 0
    %155 = vmatpush1.bf16.msra.mxu0 0
    %156 = vmatprep.subr.bf16.mxu0 0
    %157 = vmatpush1.bf16.msra.mxu0 0
    %158 = vmatprep.subr.bf16.mxu0 0
    %159 = vmatpush1.bf16.msra.mxu0 0
    %160 = vmatprep.subr.bf16.mxu0 0
    %161 = vmatpush1.bf16.msra.mxu0 0
    %162 = vmatprep.subr.bf16.mxu0 0
    %163 = vmatpush1.bf16.msra.mxu0 0
    %164 = vmatprep.subr.bf16.mxu0 0
    %165 = vmatpush1.bf16.msra.mxu0 0
    %166 = vmatprep.subr.bf16.mxu0 0
    %167 = vmatpush1.bf16.msra.mxu0 0
    %168 = vmatprep.subr.bf16.mxu0 0
    %169 = vmatpush1.bf16.msra.mxu0 0
    %170 = vmatprep.subr.bf16.mxu0 0
    %171 = vmatpush1.bf16.msra.mxu0 0
    %172 = vmatprep.subr.bf16.mxu0 0
    %173 = vmatpush1.bf16.msra.mxu0 0
    %174 = vmatprep.mubr.bf16.mxu0 0
    %175 = vmatmul.mubr.bf16.gmra.mrb[0].mxu0 %v140
    %v176 = vpop.f32.mrb[0].mxu0
    %v177 = vadd.f32 %v121, %v176
    %v178 = vpop.f32.mrb[0].mxu0
    %v179 = vpop.f32.mrb[0].mxu0
    %v180 = vadd.f32 %v124, %v179
    %v181 = vpop.f32.mrb[0].mxu0
    %182 = vdwg.mxu0
    %v183 = vld [vmem:[%s4] sm:$0x1]
    %v185 = vlaneseq
    %v186 = vshrl.u32 %v185, 7
    %v187 = vsub.s32 0, %v186
    %v188 = vrot.slane %v183, %v187
    %v190 = vadd.f32 %v177, %v188
    %v191 = vadd.f32 %v180, %v188
    %v192 = vpack.c.bf16 %v191, %v190
    %v193 = vld [vmem:[%s5] sm:$0xf]
    %v194 = vld [vmem:[%s5 + $0x4] sm:$0xf]
    %v195 = vld [vmem:[%s5 + $0x8] sm:$0xf]
    %v196 = vld [vmem:[%s5 + $0xc] sm:$0xf]
    %v197 = vld [vmem:[%s5 + $0x10] sm:$0xf]
    %v198 = vld [vmem:[%s5 + $0x14] sm:$0xf]
    %v199 = vld [vmem:[%s5 + $0x18] sm:$0xf]
    %v200 = vld [vmem:[%s5 + $0x1c] sm:$0xf]
    %v201 = vld [vmem:[%s5 + $0x20] sm:$0xf]
    %v202 = vld [vmem:[%s5 + $0x24] sm:$0xf]
    %v203 = vld [vmem:[%s5 + $0x28] sm:$0xf]
    %v204 = vld [vmem:[%s5 + $0x2c] sm:$0xf]
    %v205 = vld [vmem:[%s5 + $0x30] sm:$0xf]
    %v206 = vld [vmem:[%s5 + $0x34] sm:$0xf]
    %v207 = vld [vmem:[%s5 + $0x38] sm:$0xf]
    %v208 = vld [vmem:[%s5 + $0x3c] sm:$0xf]
    %v209 = vld [vmem:[%s6] sm:$0x1]
    %v211 = vlaneseq
    %v212 = vshrl.u32 %v211, 7
    %v213 = vsub.s32 0, %v212
    %v214 = vrot.slane %v209, %v213
    %v232 = vunpack.c.l.b16 %v193
    %v233 = vunpack.c.l.b16 %v194
    %v234 = vunpack.c.l.b16 %v195
    %v235 = vunpack.c.l.b16 %v196
    %v236 = vunpack.c.l.b16 %v197
    %v237 = vunpack.c.l.b16 %v198
    %v238 = vunpack.c.l.b16 %v199
    %v239 = vunpack.c.l.b16 %v200
    %v240 = vunpack.c.l.b16 %v201
    %v241 = vunpack.c.l.b16 %v202
    %v242 = vunpack.c.l.b16 %v203
    %v243 = vunpack.c.l.b16 %v204
    %v244 = vunpack.c.l.b16 %v205
    %v245 = vunpack.c.l.b16 %v206
    %v246 = vunpack.c.l.b16 %v207
    %v247 = vunpack.c.l.b16 %v208
    %v248 = vpack.c.b16 %v233, %v232
    %v249 = vpack.c.b16 %v235, %v234
    %v250 = vpack.c.b16 %v237, %v236
    %v251 = vpack.c.b16 %v239, %v238
    %v252 = vpack.c.b16 %v241, %v240
    %v253 = vpack.c.b16 %v243, %v242
    %v254 = vpack.c.b16 %v245, %v244
    %v255 = vpack.c.b16 %v247, %v246
    %264 = vmatprep.subr.bf16.mxu0 0
    %265 = vmatpush1.bf16.msra.mxu0 %v248
    %266 = vmatprep.subr.bf16.mxu0 0
    %267 = vmatpush1.bf16.msra.mxu0 %v249
    %268 = vmatprep.subr.bf16.mxu0 0
    %269 = vmatpush1.bf16.msra.mxu0 %v250
    %270 = vmatprep.subr.bf16.mxu0 0
    %271 = vmatpush1.bf16.msra.mxu0 %v251
    %272 = vmatprep.subr.bf16.mxu0 0
    %273 = vmatpush1.bf16.msra.mxu0 %v252
    %274 = vmatprep.subr.bf16.mxu0 0
    %275 = vmatpush1.bf16.msra.mxu0 %v253
    %276 = vmatprep.subr.bf16.mxu0 0
    %277 = vmatpush1.bf16.msra.mxu0 %v254
    %278 = vmatprep.subr.bf16.mxu0 0
    %279 = vmatpush1.bf16.msra.mxu0 %v255
    %280 = vmatprep.subr.bf16.mxu0 0
    %281 = vmatpush1.bf16.msra.mxu0 0
    %282 = vmatprep.subr.bf16.mxu0 0
    %283 = vmatpush1.bf16.msra.mxu0 0
    %284 = vmatprep.subr.bf16.mxu0 0
    %285 = vmatpush1.bf16.msra.mxu0 0
    %286 = vmatprep.subr.bf16.mxu0 0
    %287 = vmatpush1.bf16.msra.mxu0 0
    %288 = vmatprep.subr.bf16.mxu0 0
    %289 = vmatpush1.bf16.msra.mxu0 0
    %290 = vmatprep.subr.bf16.mxu0 0
    %291 = vmatpush1.bf16.msra.mxu0 0
    %292 = vmatprep.subr.bf16.mxu0 0
    %293 = vmatpush1.bf16.msra.mxu0 0
    %294 = vmatprep.subr.bf16.mxu0 0
    %295 = vmatpush1.bf16.msra.mxu0 0
    %296 = vmatprep.mubr.bf16.mxu0 0
    %297 = vmatmul.mubr.bf16.gmra.mrb[0].mxu0 %v192
    %v298 = vpop.f32.mrb[0].mxu0
    %v299 = vadd.f32 %v214, %v298
    %v300 = vpop.f32.mrb[0].mxu0
    %v301 = vpop.f32.mrb[0].mxu0
    %v302 = vadd.f32 %v214, %v301
    %v303 = vpop.f32.mrb[0].mxu0
    %304 = vdwg.mxu0
    %305 = vst [vmem:[%s7] sm:$0xff] %v299
    %306 = vst [vmem:[%s7 + $0x8] sm:$0xff] %v302
    // Predicated region
    $region38: #{encoder_mlp.1} parent=1 // pred_check
      _
    $region39: #{encoder_mlp.1} parent=1 // pred_check_branch
      %308 = sbr.rel (0) target = $region41
    $region40: #{encoder_mlp.1} parent=1 // pred_region
      _
    $region41: #{encoder_mlp.1} parent=1 // pred_fallthru
      _
    // Predicated region
    $region42: #{encoder_mlp.1} parent=1 // pred_check
      _
    $region43: #{encoder_mlp.1} parent=1 // pred_check_branch
      %310 = sbr.rel (0) target = $region45
    $region44: #{encoder_mlp.1} parent=1 // pred_region
      _
    $region45: #{encoder_mlp.1} parent=1 // pred_fallthru
      _
    %311 = vsyncpa [#allocation3], 1
    %312 = vsyncpa [#allocation5], 1

</llo_original>
